<compile_context>
chip_gen: v7x
topology: tpu7x:2x2x1
jax: 0.10.0
libtpu: 0.0.40
codegen_flags: <defaults>
</compile_context>

<pallas_src>
import functools

import jax
import jax.numpy as jnp
from jax.experimental import pallas as pl
from jax.experimental.pallas import tpu as pltpu


def _round_up(x, m):
    return ((x + m - 1) // m) * m


def fc_return_kernel(obs_ref,
                     w1_ref, b1_ref, w2_ref, b2_ref,
                     wh1_ref, bh1_ref, wh2_ref, bh2_ref,
                     out_ref):
    x = obs_ref[...]  # [TB, obs_dim] bf16

    # obs trunk: Linear -> ReLU -> Linear -> ReLU (f32 accumulation / elementwise)
    h = jnp.dot(x, w1_ref[...], preferred_element_type=jnp.float32) + b1_ref[...]
    h = jnp.maximum(h, 0.0)
    h = jnp.dot(h.astype(w2_ref.dtype), w2_ref[...],
                preferred_element_type=jnp.float32) + b2_ref[...]
    h = jnp.maximum(h, 0.0)

    # fused reward|value heads:
    #   hh  = ReLU(h @ [Wr1|Wv1] + [br1|bv1])            -> [TB, 128] lane-dense
    #   out = hh @ blockdiag(Wr2, Wv2) + [br2|bv2]        -> [TB, 2]
    hh = jnp.dot(h.astype(wh1_ref.dtype), wh1_ref[...],
                 preferred_element_type=jnp.float32) + bh1_ref[...]
    hh = jnp.maximum(hh, 0.0)
    out_ref[...] = (jnp.dot(hh.astype(wh2_ref.dtype), wh2_ref[...],
                            preferred_element_type=jnp.float32) + bh2_ref[...])


@functools.partial(jax.jit, static_argnames=("block_b",))
def fc_return_forward(obs, params, *, block_b=512):
    """params: dict of pre-transposed f32 weights [in,out] and biases [1,out]."""
    B, obs_dim = obs.shape
    compute_dtype = jnp.bfloat16

    # --- pack / fuse parameters (cheap XLA ops, constant-folded under jit) ---
    w1 = params["w1"].astype(compute_dtype)
    w2 = params["w2"].astype(compute_dtype)
    b1 = params["b1"]
    b2 = params["b2"]

    H = params["wr2"].shape[0]  # hidden_size
    wh1 = jnp.concatenate([params["wr1"], params["wv1"]], axis=1).astype(compute_dtype)
    bh1 = jnp.concatenate([params["br1"], params["bv1"]], axis=1)
    wh2 = jnp.zeros((2 * H, 2), jnp.float32)
    wh2 = wh2.at[:H, 0:1].set(params["wr2"]).at[H:, 1:2].set(params["wv2"])
    wh2 = wh2.astype(compute_dtype)
    bh2 = jnp.concatenate([params["br2"], params["bv2"]], axis=1)

    # --- batch tiling: pad B to a multiple of TB, pipeline over batch tiles ---
    TB = min(block_b, _round_up(B, 8))
    padded_B = _round_up(B, TB)
    obs_p = obs.astype(compute_dtype)
    if padded_B != B:
        obs_p = jnp.pad(obs_p, ((0, padded_B - B), (0, 0)))
    grid = (padded_B // TB,)

    def resident(shape):
        # weights/biases: full array, same block every grid step (stay in VMEM)
        return pl.BlockSpec(shape, lambda i: (0, 0))

    out = pl.pallas_call(
        fc_return_kernel,
        out_shape=jax.ShapeDtypeStruct((padded_B, 2), jnp.float32),
        grid=grid,
        in_specs=[
            pl.BlockSpec((TB, obs_dim), lambda i: (i, 0)),
            resident(w1.shape), resident(b1.shape),
            resident(w2.shape), resident(b2.shape),
            resident(wh1.shape), resident(bh1.shape),
            resident(wh2.shape), resident(bh2.shape),
        ],
        out_specs=pl.BlockSpec((TB, 2), lambda i: (i, 0)),
        compiler_params=pltpu.CompilerParams(
            dimension_semantics=("parallel",)),
    )(obs_p, w1, b1, w2, b2, wh1, bh1, wh2, bh2)

    reward = out[:B, 0:1]
    value = out[:B, 1:2]
    return reward, value


def init_params(key, obs_space_size, hidden_size=64):
    """Deterministic PyTorch-style init: U(-1/sqrt(fan_in), 1/sqrt(fan_in)).

    Weights are stored already transposed to [in_features, out_features].
    """
    def linear(key, fan_in, fan_out):
        kw, kb = jax.random.split(key)
        bound = 1.0 / jnp.sqrt(fan_in)
        w = jax.random.uniform(kw, (fan_in, fan_out), jnp.float32, -bound, bound)
        b = jax.random.uniform(kb, (1, fan_out), jnp.float32, -bound, bound)
        return w, b

    keys = jax.random.split(key, 6)
    w1, b1 = linear(keys[0], obs_space_size, hidden_size)
    w2, b2 = linear(keys[1], hidden_size, hidden_size)
    wr1, br1 = linear(keys[2], hidden_size, hidden_size)
    wr2, br2 = linear(keys[3], hidden_size, 1)
    wv1, bv1 = linear(keys[4], hidden_size, hidden_size)
    wv2, bv2 = linear(keys[5], hidden_size, 1)
    return dict(w1=w1, b1=b1, w2=w2, b2=b2,
                wr1=wr1, br1=br1, wr2=wr2, br2=br2,
                wv1=wv1, bv1=bv1, wv2=wv2, bv2=bv2)


def reference_forward(obs, p, compute_dtype=jnp.bfloat16):
    """Pure-JAX reference mirroring the PyTorch forward with the same bf16
    operand casts / f32 accumulation as the kernel."""
    def mm(x, w):
        return jnp.dot(x.astype(compute_dtype), w.astype(compute_dtype),
                       preferred_element_type=jnp.float32)
    h = jnp.maximum(mm(obs, p["w1"]) + p["b1"], 0.0)
    h = jnp.maximum(mm(h, p["w2"]) + p["b2"], 0.0)
    r = mm(jnp.maximum(mm(h, p["wr1"]) + p["br1"], 0.0), p["wr2"]) + p["br2"]
    v = mm(jnp.maximum(mm(h, p["wv1"]) + p["bv1"], 0.0), p["wv2"]) + p["bv2"]
    return r, v


if __name__ == "__main__":
    obs_space_size = 32
    hidden_size = 64
    batch = 8

    key = jax.random.PRNGKey(0)
    k_params, k_obs = jax.random.split(key)
    params = init_params(k_params, obs_space_size, hidden_size)
    obs = jax.random.normal(k_obs, (batch, obs_space_size), jnp.float32)

    reward, value = fc_return_forward(obs, params)
    jax.block_until_ready((reward, value))

    r_ref, v_ref = reference_forward(obs, params)
    assert reward.shape == (batch, 1) and value.shape == (batch, 1)
    assert jnp.allclose(reward, r_ref, atol=2e-3, rtol=2e-3), (reward, r_ref)
    assert jnp.allclose(value, v_ref, atol=2e-3, rtol=2e-3), (value, v_ref)

    print("KERNEL_OK")
</pallas_src>

<mosaic_0001>
module attributes {stable_mosaic.version = 11 : i64} {
  func.func @fc_return_kernel(%arg0: i32, %arg1: memref<8x32xbf16, #tpu.memory_space<vmem>>, %arg2: memref<32x64xbf16, #tpu.memory_space<vmem>>, %arg3: memref<1x64xf32, #tpu.memory_space<vmem>>, %arg4: memref<64x64xbf16, #tpu.memory_space<vmem>>, %arg5: memref<1x64xf32, #tpu.memory_space<vmem>>, %arg6: memref<64x128xbf16, #tpu.memory_space<vmem>>, %arg7: memref<1x128xf32, #tpu.memory_space<vmem>>, %arg8: memref<128x2xbf16, #tpu.memory_space<vmem>>, %arg9: memref<1x2xf32, #tpu.memory_space<vmem>>, %arg10: memref<8x2xf32, #tpu.memory_space<vmem>>) attributes {dimension_semantics = [#tpu.dimension_semantics<parallel>], iteration_bounds = array<i64: 1>, scalar_prefetch = 0 : i64, scratch_operands = 0 : i64, tpu.core_type = #tpu.core_type<tc>, window_params = [{transform_indices = @transform_0, window_bounds = array<i64: 8, 32>}, {pipeline_mode = #tpu.pipeline_mode<synchronous>, transform_indices = @transform_1, window_bounds = array<i64: 32, 64>}, {pipeline_mode = #tpu.pipeline_mode<synchronous>, transform_indices = @transform_2, window_bounds = array<i64: 1, 64>}, {pipeline_mode = #tpu.pipeline_mode<synchronous>, transform_indices = @transform_3, window_bounds = array<i64: 64, 64>}, {pipeline_mode = #tpu.pipeline_mode<synchronous>, transform_indices = @transform_4, window_bounds = array<i64: 1, 64>}, {pipeline_mode = #tpu.pipeline_mode<synchronous>, transform_indices = @transform_5, window_bounds = array<i64: 64, 128>}, {pipeline_mode = #tpu.pipeline_mode<synchronous>, transform_indices = @transform_6, window_bounds = array<i64: 1, 128>}, {pipeline_mode = #tpu.pipeline_mode<synchronous>, transform_indices = @transform_7, window_bounds = array<i64: 128, 2>}, {pipeline_mode = #tpu.pipeline_mode<synchronous>, transform_indices = @transform_8, window_bounds = array<i64: 1, 2>}, {transform_indices = @transform_9, window_bounds = array<i64: 8, 2>}]} {
    %c0 = arith.constant 0 : index
    %c0_0 = arith.constant 0 : index
    %0 = vector.load %arg1[%c0, %c0_0] : memref<8x32xbf16, #tpu.memory_space<vmem>>, vector<8x32xbf16>
    %c0_1 = arith.constant 0 : index
    %c0_2 = arith.constant 0 : index
    %1 = vector.load %arg2[%c0_1, %c0_2] : memref<32x64xbf16, #tpu.memory_space<vmem>>, vector<32x64xbf16>
    %cst = arith.constant dense<0.000000e+00> : vector<8x64xf32>
    %2 = tpu.matmul %0, %1, %cst {dimension_numbers = #tpu.dot_dimension_numbers<[1], [0], [0], [1], [0, 0, 1, 1], [], []>} : vector<8x32xbf16>, vector<32x64xbf16>, vector<8x64xf32> -> vector<8x64xf32>
    %c0_3 = arith.constant 0 : index
    %c0_4 = arith.constant 0 : index
    %3 = vector.load %arg3[%c0_3, %c0_4] : memref<1x64xf32, #tpu.memory_space<vmem>>, vector<1x64xf32>
    %4 = vector.broadcast %3 : vector<1x64xf32> to vector<8x64xf32>
    %5 = arith.addf %2, %4 : vector<8x64xf32>
    %cst_5 = arith.constant 0.000000e+00 : f32
    %6 = vector.broadcast %cst_5 : f32 to vector<8x64xf32>
    %7 = arith.maximumf %5, %6 : vector<8x64xf32>
    %8 = arith.truncf %7 : vector<8x64xf32> to vector<8x64xbf16>
    %c0_6 = arith.constant 0 : index
    %c0_7 = arith.constant 0 : index
    %9 = vector.load %arg4[%c0_6, %c0_7] : memref<64x64xbf16, #tpu.memory_space<vmem>>, vector<64x64xbf16>
    %cst_8 = arith.constant dense<0.000000e+00> : vector<8x64xf32>
    %10 = tpu.matmul %8, %9, %cst_8 {dimension_numbers = #tpu.dot_dimension_numbers<[1], [0], [0], [1], [0, 0, 1, 1], [], []>} : vector<8x64xbf16>, vector<64x64xbf16>, vector<8x64xf32> -> vector<8x64xf32>
    %c0_9 = arith.constant 0 : index
    %c0_10 = arith.constant 0 : index
    %11 = vector.load %arg5[%c0_9, %c0_10] : memref<1x64xf32, #tpu.memory_space<vmem>>, vector<1x64xf32>
    %12 = vector.broadcast %11 : vector<1x64xf32> to vector<8x64xf32>
    %13 = arith.addf %10, %12 : vector<8x64xf32>
    %cst_11 = arith.constant 0.000000e+00 : f32
    %14 = vector.broadcast %cst_11 : f32 to vector<8x64xf32>
    %15 = arith.maximumf %13, %14 : vector<8x64xf32>
    %16 = arith.truncf %15 : vector<8x64xf32> to vector<8x64xbf16>
    %c0_12 = arith.constant 0 : index
    %c0_13 = arith.constant 0 : index
    %17 = vector.load %arg6[%c0_12, %c0_13] : memref<64x128xbf16, #tpu.memory_space<vmem>>, vector<64x128xbf16>
    %cst_14 = arith.constant dense<0.000000e+00> : vector<8x128xf32>
    %18 = tpu.matmul %16, %17, %cst_14 {dimension_numbers = #tpu.dot_dimension_numbers<[1], [0], [0], [1], [0, 0, 1, 1], [], []>} : vector<8x64xbf16>, vector<64x128xbf16>, vector<8x128xf32> -> vector<8x128xf32>
    %c0_15 = arith.constant 0 : index
    %c0_16 = arith.constant 0 : index
    %19 = vector.load %arg7[%c0_15, %c0_16] : memref<1x128xf32, #tpu.memory_space<vmem>>, vector<1x128xf32>
    %20 = vector.broadcast %19 : vector<1x128xf32> to vector<8x128xf32>
    %21 = arith.addf %18, %20 : vector<8x128xf32>
    %cst_17 = arith.constant 0.000000e+00 : f32
    %22 = vector.broadcast %cst_17 : f32 to vector<8x128xf32>
    %23 = arith.maximumf %21, %22 : vector<8x128xf32>
    %24 = arith.truncf %23 : vector<8x128xf32> to vector<8x128xbf16>
    %c0_18 = arith.constant 0 : index
    %c0_19 = arith.constant 0 : index
    %25 = vector.load %arg8[%c0_18, %c0_19] : memref<128x2xbf16, #tpu.memory_space<vmem>>, vector<128x2xbf16>
    %cst_20 = arith.constant dense<0.000000e+00> : vector<8x2xf32>
    %26 = tpu.matmul %24, %25, %cst_20 {dimension_numbers = #tpu.dot_dimension_numbers<[1], [0], [0], [1], [0, 0, 1, 1], [], []>} : vector<8x128xbf16>, vector<128x2xbf16>, vector<8x2xf32> -> vector<8x2xf32>
    %c0_21 = arith.constant 0 : index
    %c0_22 = arith.constant 0 : index
    %27 = vector.load %arg9[%c0_21, %c0_22] : memref<1x2xf32, #tpu.memory_space<vmem>>, vector<1x2xf32>
    %28 = vector.broadcast %27 : vector<1x2xf32> to vector<8x2xf32>
    %29 = arith.addf %26, %28 : vector<8x2xf32>
    %c0_23 = arith.constant 0 : index
    %c0_24 = arith.constant 0 : index
    %30 = vector.load %arg10[%c0_23, %c0_24] : memref<8x2xf32, #tpu.memory_space<vmem>>, vector<8x2xf32>
    tpu.vector_store %arg10[%c0_23, %c0_24], %29 {strides = array<i32>} : memref<8x2xf32, #tpu.memory_space<vmem>>, vector<8x2xf32>,
    return
  }
  func.func @transform_0(%arg0: i32) -> (i32, i32) {
    %c0_i32 = arith.constant 0 : i32
    %c0_i32_0 = arith.constant 0 : i32
    return %arg0, %c0_i32 : i32, i32
  }
  func.func @transform_1(%arg0: i32) -> (i32, i32) {
    %c0_i32 = arith.constant 0 : i32
    %c0_i32_0 = arith.constant 0 : i32
    %c0_i32_1 = arith.constant 0 : i32
    return %c0_i32, %c0_i32_0 : i32, i32
  }
  func.func @transform_2(%arg0: i32) -> (i32, i32) {
    %c0_i32 = arith.constant 0 : i32
    %c0_i32_0 = arith.constant 0 : i32
    %c0_i32_1 = arith.constant 0 : i32
    return %c0_i32, %c0_i32_0 : i32, i32
  }
  func.func @transform_3(%arg0: i32) -> (i32, i32) {
    %c0_i32 = arith.constant 0 : i32
    %c0_i32_0 = arith.constant 0 : i32
    %c0_i32_1 = arith.constant 0 : i32
    return %c0_i32, %c0_i32_0 : i32, i32
  }
  func.func @transform_4(%arg0: i32) -> (i32, i32) {
    %c0_i32 = arith.constant 0 : i32
    %c0_i32_0 = arith.constant 0 : i32
    %c0_i32_1 = arith.constant 0 : i32
    return %c0_i32, %c0_i32_0 : i32, i32
  }
  func.func @transform_5(%arg0: i32) -> (i32, i32) {
    %c0_i32 = arith.constant 0 : i32
    %c0_i32_0 = arith.constant 0 : i32
    %c0_i32_1 = arith.constant 0 : i32
    return %c0_i32, %c0_i32_0 : i32, i32
  }
  func.func @transform_6(%arg0: i32) -> (i32, i32) {
    %c0_i32 = arith.constant 0 : i32
    %c0_i32_0 = arith.constant 0 : i32
    %c0_i32_1 = arith.constant 0 : i32
    return %c0_i32, %c0_i32_0 : i32, i32
  }
  func.func @transform_7(%arg0: i32) -> (i32, i32) {
    %c0_i32 = arith.constant 0 : i32
    %c0_i32_0 = arith.constant 0 : i32
    %c0_i32_1 = arith.constant 0 : i32
    return %c0_i32, %c0_i32_0 : i32, i32
  }
  func.func @transform_8(%arg0: i32) -> (i32, i32) {
    %c0_i32 = arith.constant 0 : i32
    %c0_i32_0 = arith.constant 0 : i32
    %c0_i32_1 = arith.constant 0 : i32
    return %c0_i32, %c0_i32_0 : i32, i32
  }
  func.func @transform_9(%arg0: i32) -> (i32, i32) {
    %c0_i32 = arith.constant 0 : i32
    %c0_i32_0 = arith.constant 0 : i32
    return %arg0, %c0_i32 : i32, i32
  }
}

</mosaic_0001>

<llo_original>
// kernel: fc_return_forward.1
$region0: #{fc_return_forward.1}
  #allocation0 [shape = 'u32[]', space=smem, size = 0x4, offset = 0x4, fixed_abs, tag = 'smem constant byte address 0x4 - core index']
  #allocation1 [shape = 'u32[144,128]{1,0:T(1,128)}', space=vmem, size = 0x12000, scoped, tag = 'internal scratch']
  %s0 = inlined_call_operand.vmem [shape: bf16[8,32], index: 0, kind: input, shape index: {}]
  %s1 = inlined_call_operand.vmem [shape: bf16[32,64], index: 1, kind: input, shape index: {}]
  %s2 = inlined_call_operand.vmem [shape: f32[1,64], index: 2, kind: input, shape index: {}]
  %s3 = inlined_call_operand.vmem [shape: bf16[64,64], index: 3, kind: input, shape index: {}]
  %s4 = inlined_call_operand.vmem [shape: f32[1,64], index: 4, kind: input, shape index: {}]
  %s5 = inlined_call_operand.vmem [shape: bf16[64,128], index: 5, kind: input, shape index: {}]
  %s6 = inlined_call_operand.vmem [shape: f32[1,128], index: 6, kind: input, shape index: {}]
  %s7 = inlined_call_operand.vmem [shape: bf16[128,2], index: 7, kind: input, shape index: {}]
  %s8 = inlined_call_operand.vmem [shape: f32[1,2], index: 8, kind: input, shape index: {}]
  %s9 = inlined_call_operand.vmem [shape: f32[8,2], index: 9, kind: output, shape index: {}]
  %s10 = sld [smem:[#allocation0]]
  $region46: #{fc_return_forward.1} parent=0
    _
  %s12 = ssub.s32 1, %s10
  %s13 = scalar_select 0, %s12, %s10
  // Predicated region
  $region2: #{fc_return_forward.1} parent=0 // pred_check
    _
  $region3: #{fc_return_forward.1} parent=0 // pred_check_branch
    %15 = sbr.rel (0) target = $region5
  $region4: #{fc_return_forward.1} parent=0 // pred_region
    _
  $region5: #{fc_return_forward.1} parent=0 // pred_fallthru
    _
  // Predicated region
  $region6: #{fc_return_forward.1} parent=0 // pred_check
    _
  $region7: #{fc_return_forward.1} parent=0 // pred_check_branch
    %17 = sbr.rel (0) target = $region9
  $region8: #{fc_return_forward.1} parent=0 // pred_region
    _
  $region9: #{fc_return_forward.1} parent=0 // pred_fallthru
    _
  // Predicated region
  $region10: #{fc_return_forward.1} parent=0 // pred_check
    _
  $region11: #{fc_return_forward.1} parent=0 // pred_check_branch
    %19 = sbr.rel (0) target = $region13
  $region12: #{fc_return_forward.1} parent=0 // pred_region
    _
  $region13: #{fc_return_forward.1} parent=0 // pred_fallthru
    _
  // Predicated region
  $region14: #{fc_return_forward.1} parent=0 // pred_check
    _
  $region15: #{fc_return_forward.1} parent=0 // pred_check_branch
    %21 = sbr.rel (0) target = $region17
  $region16: #{fc_return_forward.1} parent=0 // pred_region
    _
  $region17: #{fc_return_forward.1} parent=0 // pred_fallthru
    _
  // Predicated region
  $region18: #{fc_return_forward.1} parent=0 // pred_check
    _
  $region19: #{fc_return_forward.1} parent=0 // pred_check_branch
    %23 = sbr.rel (0) target = $region21
  $region20: #{fc_return_forward.1} parent=0 // pred_region
    _
  $region21: #{fc_return_forward.1} parent=0 // pred_fallthru
    _
  // Predicated region
  $region22: #{fc_return_forward.1} parent=0 // pred_check
    _
  $region23: #{fc_return_forward.1} parent=0 // pred_check_branch
    %25 = sbr.rel (0) target = $region25
  $region24: #{fc_return_forward.1} parent=0 // pred_region
    _
  $region25: #{fc_return_forward.1} parent=0 // pred_fallthru
    _
  // Predicated region
  $region26: #{fc_return_forward.1} parent=0 // pred_check
    _
  $region27: #{fc_return_forward.1} parent=0 // pred_check_branch
    %27 = sbr.rel (0) target = $region29
  $region28: #{fc_return_forward.1} parent=0 // pred_region
    _
  $region29: #{fc_return_forward.1} parent=0 // pred_fallthru
    _
  // Predicated region
  $region30: #{fc_return_forward.1} parent=0 // pred_check
    _
  $region31: #{fc_return_forward.1} parent=0 // pred_check_branch
    %29 = sbr.rel (0) target = $region33
  $region32: #{fc_return_forward.1} parent=0 // pred_region
    _
  $region33: #{fc_return_forward.1} parent=0 // pred_fallthru
    _
  // Predicated region
  $region34: #{fc_return_forward.1} parent=0 // pred_check
    _
  $region35: #{fc_return_forward.1} parent=0 // pred_check_branch
    %31 = sbr.rel (0) target = $region37
  $region36: #{fc_return_forward.1} parent=0 // pred_region
    _
  $region37: #{fc_return_forward.1} parent=0 // pred_fallthru
    _
  %v33 = vld [vmem:[%s0] sm:$0xf]
  %v34 = vld [vmem:[%s1] sm:$0xf]
  %v35 = vld [vmem:[%s1 + $0x4] sm:$0xf]
  %v36 = vld [vmem:[%s1 + $0x8] sm:$0xf]
  %v37 = vld [vmem:[%s1 + $0xc] sm:$0xf]
  %v38 = vld [vmem:[%s2] sm:$0x1]
  %v40 = vlaneseq
  %v41 = vshrl.u32 %v40, 7
  %v42 = vsub.s32 0, %v41
  %v43 = vrot.slane %v38, %v42
  %v49 = vunpack.c.l.b16 %v34
  %v50 = vunpack.c.l.b16 %v35
  %v51 = vunpack.c.l.b16 %v36
  %v52 = vunpack.c.l.b16 %v37
  %v53 = vpack.c.b16 %v50, %v49
  %v54 = vpack.c.b16 %v52, %v51
  %vm57 = vcmask 261120
  %v59 = vsel %vm57, %v33, 0
  %61 = vmatprep.subr.bf16.mxu0 0
  %62 = vmatpush1.bf16.msra.mxu0 %v53
  %63 = vmatprep.subr.bf16.mxu0 0
  %64 = vmatpush1.bf16.msra.mxu0 %v54
  %65 = vmatprep.subr.bf16.mxu0 0
  %66 = vmatpush1.bf16.msra.mxu0 0
  %67 = vmatprep.subr.bf16.mxu0 0
  %68 = vmatpush1.bf16.msra.mxu0 0
  %69 = vmatprep.subr.bf16.mxu0 0
  %70 = vmatpush1.bf16.msra.mxu0 0
  %71 = vmatprep.subr.bf16.mxu0 0
  %72 = vmatpush1.bf16.msra.mxu0 0
  %73 = vmatprep.subr.bf16.mxu0 0
  %74 = vmatpush1.bf16.msra.mxu0 0
  %75 = vmatprep.subr.bf16.mxu0 0
  %76 = vmatpush1.bf16.msra.mxu0 0
  %77 = vmatprep.subr.bf16.mxu0 0
  %78 = vmatpush1.bf16.msra.mxu0 0
  %79 = vmatprep.subr.bf16.mxu0 0
  %80 = vmatpush1.bf16.msra.mxu0 0
  %81 = vmatprep.subr.bf16.mxu0 0
  %82 = vmatpush1.bf16.msra.mxu0 0
  %83 = vmatprep.subr.bf16.mxu0 0
  %84 = vmatpush1.bf16.msra.mxu0 0
  %85 = vmatprep.subr.bf16.mxu0 0
  %86 = vmatpush1.bf16.msra.mxu0 0
  %87 = vmatprep.subr.bf16.mxu0 0
  %88 = vmatpush1.bf16.msra.mxu0 0
  %89 = vmatprep.subr.bf16.mxu0 0
  %90 = vmatpush1.bf16.msra.mxu0 0
  %91 = vmatprep.subr.bf16.mxu0 0
  %92 = vmatpush1.bf16.msra.mxu0 0
  %93 = vmatprep.mubr.bf16.mxu0 0
  %94 = vmatmul.mubr.bf16.gmra.mrb[0].mxu0 %v59
  %v95 = vpop.f32.mrb[0].mxu0
  %v96 = vadd.f32 %v43, %v95
  %v97 = vpop.f32.mrb[0].mxu0
  %v98 = vpop.f32.mrb[0].mxu0
  %v99 = vpop.f32.mrb[0].mxu0
  %100 = vdwg.mxu0
  %v101 = vmax.f32 %v96, 0.0
  %v102 = vpack.c.bf16 %v101, %v101
  %v103 = vld [vmem:[%s3] sm:$0xf]
  %v104 = vld [vmem:[%s3 + $0x4] sm:$0xf]
  %v105 = vld [vmem:[%s3 + $0x8] sm:$0xf]
  %v106 = vld [vmem:[%s3 + $0xc] sm:$0xf]
  %v107 = vld [vmem:[%s3 + $0x10] sm:$0xf]
  %v108 = vld [vmem:[%s3 + $0x14] sm:$0xf]
  %v109 = vld [vmem:[%s3 + $0x18] sm:$0xf]
  %v110 = vld [vmem:[%s3 + $0x1c] sm:$0xf]
  %v111 = vld [vmem:[%s4] sm:$0x1]
  %v113 = vlaneseq
  %v114 = vshrl.u32 %v113, 7
  %v115 = vsub.s32 0, %v114
  %v116 = vrot.slane %v111, %v115
  %v126 = vunpack.c.l.b16 %v103
  %v127 = vunpack.c.l.b16 %v104
  %v128 = vunpack.c.l.b16 %v105
  %v129 = vunpack.c.l.b16 %v106
  %v130 = vunpack.c.l.b16 %v107
  %v131 = vunpack.c.l.b16 %v108
  %v132 = vunpack.c.l.b16 %v109
  %v133 = vunpack.c.l.b16 %v110
  %v134 = vpack.c.b16 %v127, %v126
  %v135 = vpack.c.b16 %v129, %v128
  %v136 = vpack.c.b16 %v131, %v130
  %v137 = vpack.c.b16 %v133, %v132
  %vm142 = vcmask 523264
  %v144 = vsel %vm142, %v102, 0
  %146 = vmatprep.subr.bf16.mxu0 0
  %147 = vmatpush1.bf16.msra.mxu0 %v134
  %148 = vmatprep.subr.bf16.mxu0 0
  %149 = vmatpush1.bf16.msra.mxu0 %v135
  %150 = vmatprep.subr.bf16.mxu0 0
  %151 = vmatpush1.bf16.msra.mxu0 %v136
  %152 = vmatprep.subr.bf16.mxu0 0
  %153 = vmatpush1.bf16.msra.mxu0 %v137
  %154 = vmatprep.subr.bf16.mxu0 0
  %155 = vmatpush1.bf16.msra.mxu0 0
  %156 = vmatprep.subr.bf16.mxu0 0
  %157 = vmatpush1.bf16.msra.mxu0 0
  %158 = vmatprep.subr.bf16.mxu0 0
  %159 = vmatpush1.bf16.msra.mxu0 0
  %160 = vmatprep.subr.bf16.mxu0 0
  %161 = vmatpush1.bf16.msra.mxu0 0
  %162 = vmatprep.subr.bf16.mxu0 0
  %163 = vmatpush1.bf16.msra.mxu0 0
  %164 = vmatprep.subr.bf16.mxu0 0
  %165 = vmatpush1.bf16.msra.mxu0 0
  %166 = vmatprep.subr.bf16.mxu0 0
  %167 = vmatpush1.bf16.msra.mxu0 0
  %168 = vmatprep.subr.bf16.mxu0 0
  %169 = vmatpush1.bf16.msra.mxu0 0
  %170 = vmatprep.subr.bf16.mxu0 0
  %171 = vmatpush1.bf16.msra.mxu0 0
  %172 = vmatprep.subr.bf16.mxu0 0
  %173 = vmatpush1.bf16.msra.mxu0 0
  %174 = vmatprep.subr.bf16.mxu0 0
  %175 = vmatpush1.bf16.msra.mxu0 0
  %176 = vmatprep.subr.bf16.mxu0 0
  %177 = vmatpush1.bf16.msra.mxu0 0
  %178 = vmatprep.mubr.bf16.mxu0 0
  %179 = vmatmul.mubr.bf16.gmra.mrb[0].mxu0 %v144
  %v180 = vpop.f32.mrb[0].mxu0
  %v181 = vadd.f32 %v116, %v180
  %v182 = vpop.f32.mrb[0].mxu0
  %v183 = vpop.f32.mrb[0].mxu0
  %v184 = vpop.f32.mrb[0].mxu0
  %185 = vdwg.mxu0
  %v186 = vmax.f32 %v181, 0.0
  %v187 = vpack.c.bf16 %v186, %v186
  %v188 = vld [vmem:[%s5] sm:$0xf]
  %v189 = vld [vmem:[%s5 + $0x4] sm:$0xf]
  %v190 = vld [vmem:[%s5 + $0x8] sm:$0xf]
  %v191 = vld [vmem:[%s5 + $0xc] sm:$0xf]
  %v192 = vld [vmem:[%s5 + $0x10] sm:$0xf]
  %v193 = vld [vmem:[%s5 + $0x14] sm:$0xf]
  %v194 = vld [vmem:[%s5 + $0x18] sm:$0xf]
  %v195 = vld [vmem:[%s5 + $0x1c] sm:$0xf]
  %v196 = vld [vmem:[%s6] sm:$0x1]
  %v198 = vlaneseq
  %v199 = vshrl.u32 %v198, 7
  %v200 = vsub.s32 0, %v199
  %v201 = vrot.slane %v196, %v200
  %v211 = vunpack.c.l.b16 %v188
  %v212 = vunpack.c.l.b16 %v189
  %v213 = vunpack.c.l.b16 %v190
  %v214 = vunpack.c.l.b16 %v191
  %v215 = vunpack.c.l.b16 %v192
  %v216 = vunpack.c.l.b16 %v193
  %v217 = vunpack.c.l.b16 %v194
  %v218 = vunpack.c.l.b16 %v195
  %v219 = vpack.c.b16 %v212, %v211
  %v220 = vpack.c.b16 %v214, %v213
  %v221 = vpack.c.b16 %v216, %v215
  %v222 = vpack.c.b16 %v218, %v217
  %v228 = vsel %vm142, %v187, 0
  %230 = vmatprep.subr.bf16.mxu0 0
  %231 = vmatpush1.bf16.msra.mxu0 %v219
  %232 = vmatprep.subr.bf16.mxu0 0
  %233 = vmatpush1.bf16.msra.mxu0 %v220
  %234 = vmatprep.subr.bf16.mxu0 0
  %235 = vmatpush1.bf16.msra.mxu0 %v221
  %236 = vmatprep.subr.bf16.mxu0 0
  %237 = vmatpush1.bf16.msra.mxu0 %v222
  %238 = vmatprep.subr.bf16.mxu0 0
  %239 = vmatpush1.bf16.msra.mxu0 0
  %240 = vmatprep.subr.bf16.mxu0 0
  %241 = vmatpush1.bf16.msra.mxu0 0
  %242 = vmatprep.subr.bf16.mxu0 0
  %243 = vmatpush1.bf16.msra.mxu0 0
  %244 = vmatprep.subr.bf16.mxu0 0
  %245 = vmatpush1.bf16.msra.mxu0 0
  %246 = vmatprep.subr.bf16.mxu0 0
  %247 = vmatpush1.bf16.msra.mxu0 0
  %248 = vmatprep.subr.bf16.mxu0 0
  %249 = vmatpush1.bf16.msra.mxu0 0
  %250 = vmatprep.subr.bf16.mxu0 0
  %251 = vmatpush1.bf16.msra.mxu0 0
  %252 = vmatprep.subr.bf16.mxu0 0
  %253 = vmatpush1.bf16.msra.mxu0 0
  %254 = vmatprep.subr.bf16.mxu0 0
  %255 = vmatpush1.bf16.msra.mxu0 0
  %256 = vmatprep.subr.bf16.mxu0 0
  %257 = vmatpush1.bf16.msra.mxu0 0
  %258 = vmatprep.subr.bf16.mxu0 0
  %259 = vmatpush1.bf16.msra.mxu0 0
  %260 = vmatprep.subr.bf16.mxu0 0
  %261 = vmatpush1.bf16.msra.mxu0 0
  %262 = vmatprep.mubr.bf16.mxu0 0
  %263 = vmatmul.mubr.bf16.gmra.mrb[0].mxu0 %v228
  %v264 = vpop.f32.mrb[0].mxu0
  %v265 = vadd.f32 %v201, %v264
  %v266 = vpop.f32.mrb[0].mxu0
  %v267 = vpop.f32.mrb[0].mxu0
  %v268 = vpop.f32.mrb[0].mxu0
  %269 = vdwg.mxu0
  %v270 = vmax.f32 %v265, 0.0
  %v271 = vpack.c.bf16 %v270, %v270
  %v272 = vld [vmem:[%s7] sm:$0xf]
  %v273 = vld [vmem:[%s7 + $0x4] sm:$0xf]
  %v274 = vld [vmem:[%s7 + $0x8] sm:$0xf]
  %v275 = vld [vmem:[%s7 + $0xc] sm:$0xf]
  %v276 = vld [vmem:[%s7 + $0x10] sm:$0xf]
  %v277 = vld [vmem:[%s7 + $0x14] sm:$0xf]
  %v278 = vld [vmem:[%s7 + $0x18] sm:$0xf]
  %v279 = vld [vmem:[%s7 + $0x1c] sm:$0xf]
  %v280 = vld [vmem:[%s7 + $0x20] sm:$0xf]
  %v281 = vld [vmem:[%s7 + $0x24] sm:$0xf]
  %v282 = vld [vmem:[%s7 + $0x28] sm:$0xf]
  %v283 = vld [vmem:[%s7 + $0x2c] sm:$0xf]
  %v284 = vld [vmem:[%s7 + $0x30] sm:$0xf]
  %v285 = vld [vmem:[%s7 + $0x34] sm:$0xf]
  %v286 = vld [vmem:[%s7 + $0x38] sm:$0xf]
  %v287 = vld [vmem:[%s7 + $0x3c] sm:$0xf]
  %v288 = vld [vmem:[%s8] sm:$0x1]
  %v290 = vlaneseq
  %v291 = vshrl.u32 %v290, 7
  %v292 = vsub.s32 0, %v291
  %v293 = vrot.slane %v288, %v292
  %v311 = vunpack.c.l.b16 %v272
  %v312 = vunpack.c.l.b16 %v273
  %v313 = vunpack.c.l.b16 %v274
  %v314 = vunpack.c.l.b16 %v275
  %v315 = vunpack.c.l.b16 %v276
  %v316 = vunpack.c.l.b16 %v277
  %v317 = vunpack.c.l.b16 %v278
  %v318 = vunpack.c.l.b16 %v279
  %v319 = vunpack.c.l.b16 %v280
  %v320 = vunpack.c.l.b16 %v281
  %v321 = vunpack.c.l.b16 %v282
  %v322 = vunpack.c.l.b16 %v283
  %v323 = vunpack.c.l.b16 %v284
  %v324 = vunpack.c.l.b16 %v285
  %v325 = vunpack.c.l.b16 %v286
  %v326 = vunpack.c.l.b16 %v287
  %v327 = vpack.c.b16 %v312, %v311
  %v328 = vpack.c.b16 %v314, %v313
  %v329 = vpack.c.b16 %v316, %v315
  %v330 = vpack.c.b16 %v318, %v317
  %v331 = vpack.c.b16 %v320, %v319
  %v332 = vpack.c.b16 %v322, %v321
  %v333 = vpack.c.b16 %v324, %v323
  %v334 = vpack.c.b16 %v326, %v325
  %343 = vmatprep.subr.bf16.mxu0 0
  %344 = vmatpush1.bf16.msra.mxu0 %v327
  %345 = vmatprep.subr.bf16.mxu0 0
  %346 = vmatpush1.bf16.msra.mxu0 %v328
  %347 = vmatprep.subr.bf16.mxu0 0
  %348 = vmatpush1.bf16.msra.mxu0 %v329
  %349 = vmatprep.subr.bf16.mxu0 0
  %350 = vmatpush1.bf16.msra.mxu0 %v330
  %351 = vmatprep.subr.bf16.mxu0 0
  %352 = vmatpush1.bf16.msra.mxu0 %v331
  %353 = vmatprep.subr.bf16.mxu0 0
  %354 = vmatpush1.bf16.msra.mxu0 %v332
  %355 = vmatprep.subr.bf16.mxu0 0
  %356 = vmatpush1.bf16.msra.mxu0 %v333
  %357 = vmatprep.subr.bf16.mxu0 0
  %358 = vmatpush1.bf16.msra.mxu0 %v334
  %359 = vmatprep.subr.bf16.mxu0 0
  %360 = vmatpush1.bf16.msra.mxu0 0
  %361 = vmatprep.subr.bf16.mxu0 0
  %362 = vmatpush1.bf16.msra.mxu0 0
  %363 = vmatprep.subr.bf16.mxu0 0
  %364 = vmatpush1.bf16.msra.mxu0 0
  %365 = vmatprep.subr.bf16.mxu0 0
  %366 = vmatpush1.bf16.msra.mxu0 0
  %367 = vmatprep.subr.bf16.mxu0 0
  %368 = vmatpush1.bf16.msra.mxu0 0
  %369 = vmatprep.subr.bf16.mxu0 0
  %370 = vmatpush1.bf16.msra.mxu0 0
  %371 = vmatprep.subr.bf16.mxu0 0
  %372 = vmatpush1.bf16.msra.mxu0 0
  %373 = vmatprep.subr.bf16.mxu0 0
  %374 = vmatpush1.bf16.msra.mxu0 0
  %375 = vmatprep.mubr.bf16.mxu0 0
  %376 = vmatmul.mubr.bf16.gmra.mrb[0].mxu0 %v271
  %v377 = vpop.f32.mrb[0].mxu0
  %v378 = vadd.f32 %v293, %v377
  %v379 = vpop.f32.mrb[0].mxu0
  %v380 = vpop.f32.mrb[0].mxu0
  %v381 = vpop.f32.mrb[0].mxu0
  %382 = vdwg.mxu0
  %vm383 = vcmask 15360
  %384 = vst.msk [vmem:[%s9] sm:$0xff] %vm383, %v378
  // Predicated region
  $region38: #{fc_return_forward.1} parent=0 // pred_check
    _
  $region39: #{fc_return_forward.1} parent=0 // pred_check_branch
    %386 = sbr.rel (0) target = $region41
  $region40: #{fc_return_forward.1} parent=0 // pred_region
    _
  $region41: #{fc_return_forward.1} parent=0 // pred_fallthru
    _
  // Predicated region
  $region42: #{fc_return_forward.1} parent=0 // pred_check
    _
  $region43: #{fc_return_forward.1} parent=0 // pred_check_branch
    %388 = sbr.rel (0) target = $region45
  $region44: #{fc_return_forward.1} parent=0 // pred_region
    _
  $region45: #{fc_return_forward.1} parent=0 // pred_fallthru
    _

</llo_original>
